<compile_context>
chip_gen: v5e
topology: v5e:2x2
jax: 0.10.0
libtpu: 0.0.40
codegen_flags: <defaults>
</compile_context>

<pallas_src>
import jax
import jax.numpy as jnp
from jax.experimental import pallas as pl
from jax.experimental.pallas import tpu as pltpu


# --------------------------------------------------------------------------- #
# Kernel
# --------------------------------------------------------------------------- #
def rope_kernel(x_ref, w_ref, b_ref, cs_ref, out_ref):
    # x_ref:   (1, TS, H)   activation tile for one (batch, seq-tile) step
    # w_ref:   (H, 4T)      [W | W_rot]  (pair-swap rotation folded into weight)
    # b_ref:   (1, 4T)      [b | b_rot]
    # cs_ref:  (TS, 4T)     [cos | cos | sin | sin] per-position scales
    # out_ref: (1, TS, 2T)  sigmoid(q_rope | k_rope); wrapper splits q / k
    t2 = out_ref.shape[-1]                                   # 2T
    x = x_ref[0]                                             # (TS, H)
    # One MXU matmul yields both the plain and the pair-rotated projections.
    y = jnp.dot(x, w_ref[...], preferred_element_type=jnp.float32) + b_ref[...]
    t = y * cs_ref[...]                                      # (TS, 4T)
    rot = t[:, :t2] + t[:, t2:]                              # out*cos + out_rot*sin
    out_ref[0] = jax.nn.sigmoid(rot).astype(out_ref.dtype)


# --------------------------------------------------------------------------- #
# Wrapper helpers
# --------------------------------------------------------------------------- #
def _pair_rotate_last(m):
    """[..., 2i] <- -[..., 2i+1] ;  [..., 2i+1] <- [..., 2i]."""
    even = m[..., 0::2]
    odd = m[..., 1::2]
    return jnp.stack([-odd, even], axis=-1).reshape(m.shape)


def _pick_seq_tile(S, H, itemsize, budget_bytes=20 * 1024 * 1024):
    """Largest power-of-two seq tile whose double-buffered working set fits a
    conservative VMEM budget (safe for v7x's 32 MiB default scoped limit)."""
    # double-buffered lane-padded weight (4T -> 128 lanes) + cs/out tiles
    fixed = 2 * H * 128 * 4
    ts = 512
    while ts > 16 and (2 * ts * H * itemsize + fixed + 4 * ts * 128 * 4) > budget_bytes:
        ts //= 2
    if S <= ts:
        return S                       # full-extent block is always legal
    return ts                          # power of two >= 16 -> (8,128)-aligned


def rope_forward(state, W, b, num_ner_tag, *, compute_dtype=None, seq_tile=None):
    """state: (B, S, H) f32;  W: (H, 2T);  b: (2T,)  ->  (qw, kw), each (B, S, T)."""
    B, S, H = state.shape
    T = num_ner_tag
    assert T % 2 == 0
    T2, T4 = 2 * T, 4 * T

    # ---- fold the pair-swap rotation into the dense weight / bias ----
    W = W.astype(jnp.float32)
    b = b.astype(jnp.float32)
    Wc = jnp.concatenate([W, _pair_rotate_last(W)], axis=-1)          # (H, 4T)
    bc = jnp.concatenate([b, _pair_rotate_last(b)], axis=-1).reshape(1, T4)

    # ---- sinusoidal position-embedding constants, pre-tiled to width 4T ----
    pos = jnp.arange(S, dtype=jnp.float32)[:, None]                   # (S, 1)
    inv_freq = jnp.power(10000.0,
                         -2.0 * jnp.arange(T // 2, dtype=jnp.float32) / T)
    ang = pos * inv_freq                                              # (S, T//2)
    cos_pos = jnp.repeat(jnp.cos(ang), 2, axis=-1)                    # (S, T)
    sin_pos = jnp.repeat(jnp.sin(ang), 2, axis=-1)                    # (S, T)
    csm = jnp.concatenate([cos_pos, cos_pos, sin_pos, sin_pos], axis=-1)  # (S, 4T)

    # ---- optional bf16 activations/weight (f32 accumulation kept) ----
    if compute_dtype is not None:
        state = state.astype(compute_dtype)
        Wc = Wc.astype(compute_dtype)

    # ---- sequence tiling (bounds VMEM, feeds the pipeline / both v7x TCs) ----
    itemsize = jnp.dtype(state.dtype).itemsize
    ts = seq_tile if seq_tile is not None else _pick_seq_tile(S, H, itemsize)
    ts = min(ts, S)
    if ts < S:
        assert ts % 8 == 0, "sequence tile must be a multiple of 8"
    num_s_tiles = pl.cdiv(S, ts)       # ragged last tile handled by Pallas masking

    fused = pl.pallas_call(
        rope_kernel,
        out_shape=jax.ShapeDtypeStruct((B, S, T2), jnp.float32),
        grid_spec=pltpu.PrefetchScalarGridSpec(
            num_scalar_prefetch=0,
            grid=(B, num_s_tiles),
            in_specs=[
                pl.BlockSpec((1, ts, H), lambda bi, si: (bi, si, 0)),   # state tile
                pl.BlockSpec((H, T4), lambda bi, si: (0, 0)),           # Wc (resident)
                pl.BlockSpec((1, T4), lambda bi, si: (0, 0)),           # bc (resident)
                pl.BlockSpec((ts, T4), lambda bi, si: (si, 0)),         # cos/sin tile
            ],
            out_specs=pl.BlockSpec((1, ts, T2), lambda bi, si: (bi, si, 0)),
        ),
        compiler_params=pltpu.CompilerParams(
            dimension_semantics=("parallel", "parallel"),
            vmem_limit_bytes=32 * 1024 * 1024,
        ),
    )(state, Wc, bc, csm)

    return fused[..., :T], fused[..., T:]


# --------------------------------------------------------------------------- #
# Pure-JAX reference (mirror of the PyTorch forward)
# --------------------------------------------------------------------------- #
def rope_reference(state, W, b, num_ner_tag):
    T = num_ner_tag
    B, S, H = state.shape
    out = state @ W + b                                               # (B, S, 2T)
    q, k = out[..., :T], out[..., T:]                                 # (B, S, T)
    pos = jnp.arange(S, dtype=jnp.float32)[:, None]
    inv_freq = jnp.power(10000.0,
                         -2.0 * jnp.arange(T // 2, dtype=jnp.float32) / T)
    ang = pos * inv_freq
    cos = jnp.repeat(jnp.cos(ang), 2, axis=-1)
    sin = jnp.repeat(jnp.sin(ang), 2, axis=-1)

    def rot(v):
        v2 = jnp.stack([-v[..., 1::2], v[..., ::2]], axis=-1).reshape(v.shape)
        return v * cos + v2 * sin

    return jax.nn.sigmoid(rot(q)), jax.nn.sigmoid(rot(k))


# --------------------------------------------------------------------------- #
# Self-test
# --------------------------------------------------------------------------- #
if __name__ == "__main__":
    key = jax.random.PRNGKey(0)
    k1, k2, k3, k4, k5, k6 = jax.random.split(key, 6)

    # --- case 1: small shapes from the module spec (single seq tile) ---
    B, S, H, T = 2, 8, 32, 8
    state = jax.random.normal(k1, (B, S, H), dtype=jnp.float32)
    W = jax.random.normal(k2, (H, 2 * T), dtype=jnp.float32) * 0.05
    b = jax.random.normal(k3, (2 * T,), dtype=jnp.float32) * 0.05

    qw, kw = rope_forward(state, W, b, T)
    qw, kw = jax.block_until_ready((qw, kw))
    qw_ref, kw_ref = rope_reference(state, W, b, T)
    assert jnp.allclose(qw, qw_ref, atol=1e-5, rtol=1e-5)
    assert jnp.allclose(kw, kw_ref, atol=1e-5, rtol=1e-5)

    # --- case 2: exercises multi-tile grid + ragged last sequence tile ---
    B2, S2, H2 = 2, 40, 128
    state2 = jax.random.normal(k4, (B2, S2, H2), dtype=jnp.float32)
    W2 = jax.random.normal(k5, (H2, 2 * T), dtype=jnp.float32) * 0.05
    b2 = jax.random.normal(k6, (2 * T,), dtype=jnp.float32) * 0.05

    qw2, kw2 = rope_forward(state2, W2, b2, T, seq_tile=16)
    qw2, kw2 = jax.block_until_ready((qw2, kw2))
    qw2_ref, kw2_ref = rope_reference(state2, W2, b2, T)
    assert jnp.allclose(qw2, qw2_ref, atol=1e-5, rtol=1e-5)
    assert jnp.allclose(kw2, kw2_ref, atol=1e-5, rtol=1e-5)

    print("KERNEL_OK")
</pallas_src>

<mosaic_0001>
module attributes {stable_mosaic.version = 11 : i64} {
  func.func @rope_kernel(%arg0: i32, %arg1: i32, %arg2: memref<1x8x32xf32, #tpu.memory_space<vmem>>, %arg3: memref<32x32xf32, #tpu.memory_space<vmem>>, %arg4: memref<1x32xf32, #tpu.memory_space<vmem>>, %arg5: memref<8x32xf32, #tpu.memory_space<vmem>>, %arg6: memref<1x8x16xf32, #tpu.memory_space<vmem>>) attributes {dimension_semantics = [#tpu.dimension_semantics<parallel>, #tpu.dimension_semantics<parallel>], iteration_bounds = array<i64: 2, 1>, scalar_prefetch = 0 : i64, scratch_operands = 0 : i64, tpu.core_type = #tpu.core_type<tc>, window_params = [{transform_indices = @transform_0, window_bounds = array<i64: 1, 8, 32>}, {pipeline_mode = #tpu.pipeline_mode<synchronous>, transform_indices = @transform_1, window_bounds = array<i64: 32, 32>}, {pipeline_mode = #tpu.pipeline_mode<synchronous>, transform_indices = @transform_2, window_bounds = array<i64: 1, 32>}, {transform_indices = @transform_3, window_bounds = array<i64: 8, 32>}, {transform_indices = @transform_4, window_bounds = array<i64: 1, 8, 16>}]} {
    %c0 = arith.constant 0 : index
    %c0_0 = arith.constant 0 : index
    %c0_1 = arith.constant 0 : index
    %0 = vector.load %arg2[%c0, %c0_0, %c0_1] : memref<1x8x32xf32, #tpu.memory_space<vmem>>, vector<1x8x32xf32>
    %1 = vector.shape_cast %0 : vector<1x8x32xf32> to vector<8x32xf32>
    %c0_2 = arith.constant 0 : index
    %c0_3 = arith.constant 0 : index
    %2 = vector.load %arg3[%c0_2, %c0_3] : memref<32x32xf32, #tpu.memory_space<vmem>>, vector<32x32xf32>
    %cst = arith.constant dense<0.000000e+00> : vector<8x32xf32>
    %3 = tpu.matmul %1, %2, %cst {dimension_numbers = #tpu.dot_dimension_numbers<[1], [0], [0], [1], [0, 0, 1, 1], [], []>} : vector<8x32xf32>, vector<32x32xf32>, vector<8x32xf32> -> vector<8x32xf32>
    %c0_4 = arith.constant 0 : index
    %c0_5 = arith.constant 0 : index
    %4 = vector.load %arg4[%c0_4, %c0_5] : memref<1x32xf32, #tpu.memory_space<vmem>>, vector<1x32xf32>
    %5 = vector.broadcast %4 : vector<1x32xf32> to vector<8x32xf32>
    %6 = arith.addf %3, %5 : vector<8x32xf32>
    %c0_6 = arith.constant 0 : index
    %c0_7 = arith.constant 0 : index
    %7 = vector.load %arg5[%c0_6, %c0_7] : memref<8x32xf32, #tpu.memory_space<vmem>>, vector<8x32xf32>
    %8 = arith.mulf %6, %7 : vector<8x32xf32>
    %9 = vector.extract_strided_slice %8 {offsets = [0, 0], sizes = [8, 16], strides = [1, 1]} : vector<8x32xf32> to vector<8x16xf32>
    %10 = vector.extract_strided_slice %8 {offsets = [0, 16], sizes = [8, 16], strides = [1, 1]} : vector<8x32xf32> to vector<8x16xf32>
    %11 = arith.addf %9, %10 : vector<8x16xf32>
    %12 = arith.negf %11 : vector<8x16xf32>
    %13 = math.exp %12 : vector<8x16xf32>
    %cst_8 = arith.constant 1.000000e+00 : f32
    %14 = vector.broadcast %cst_8 : f32 to vector<8x16xf32>
    %15 = arith.addf %14, %13 : vector<8x16xf32>
    %16 = arith.divf %14, %15 : vector<8x16xf32>
    %c0_9 = arith.constant 0 : index
    %c0_10 = arith.constant 0 : index
    %c0_11 = arith.constant 0 : index
    %17 = vector.load %arg6[%c0_9, %c0_10, %c0_11] : memref<1x8x16xf32, #tpu.memory_space<vmem>>, vector<1x8x16xf32>
    %18 = vector.shape_cast %17 : vector<1x8x16xf32> to vector<8x16xf32>
    %19 = vector.shape_cast %16 : vector<8x16xf32> to vector<1x8x16xf32>
    tpu.vector_store %arg6[%c0_9, %c0_10, %c0_11], %19 {strides = array<i32>} : memref<1x8x16xf32, #tpu.memory_space<vmem>>, vector<1x8x16xf32>,
    return
  }
  func.func @transform_0(%arg0: i32, %arg1: i32) -> (i32, i32, i32) {
    %c0_i32 = arith.constant 0 : i32
    %c0_i32_0 = arith.constant 0 : i32
    return %arg0, %arg1, %c0_i32 : i32, i32, i32
  }
  func.func @transform_1(%arg0: i32, %arg1: i32) -> (i32, i32) {
    %c0_i32 = arith.constant 0 : i32
    %c0_i32_0 = arith.constant 0 : i32
    %c0_i32_1 = arith.constant 0 : i32
    return %c0_i32, %c0_i32_0 : i32, i32
  }
  func.func @transform_2(%arg0: i32, %arg1: i32) -> (i32, i32) {
    %c0_i32 = arith.constant 0 : i32
    %c0_i32_0 = arith.constant 0 : i32
    %c0_i32_1 = arith.constant 0 : i32
    return %c0_i32, %c0_i32_0 : i32, i32
  }
  func.func @transform_3(%arg0: i32, %arg1: i32) -> (i32, i32) {
    %c0_i32 = arith.constant 0 : i32
    %c0_i32_0 = arith.constant 0 : i32
    return %arg1, %c0_i32 : i32, i32
  }
  func.func @transform_4(%arg0: i32, %arg1: i32) -> (i32, i32, i32) {
    %c0_i32 = arith.constant 0 : i32
    %c0_i32_0 = arith.constant 0 : i32
    return %arg0, %arg1, %c0_i32 : i32, i32, i32
  }
}

</mosaic_0001>

<llo_original>
// kernel: tpu_custom_call.1
$region0: #{tpu_custom_call.1}
  #allocation0 [shape = 'u32[]', space=smem, size = 0x4, offset = 0x4, fixed_abs, tag = 'smem constant byte address 0x4 - core index']
  #allocation1 [shape = 'u32[72,128]{1,0:T(1,128)}', space=vmem, size = 0x9000, scoped, tag = 'internal scratch']
  %s0 = inlined_call_operand.hbm [shape: f32[2,8,32], index: 0, kind: input, shape index: {}]
  %s1 = inlined_call_operand.hbm [shape: f32[32,32], index: 1, kind: input, shape index: {}]
  %s2 = inlined_call_operand.vmem [shape: f32[1,32], index: 2, kind: input, shape index: {}]
  %s3 = inlined_call_operand.hbm [shape: f32[8,32], index: 3, kind: input, shape index: {}]
  %s4 = inlined_call_operand.hbm [shape: f32[2,8,16], index: 4, kind: output, shape index: {}]
  %s5 = sld [smem:[#allocation0]]
  $region61: #{tpu_custom_call.1} parent=0
    _
  %s7 = ssub.s32 1, %s5
  %s8 = scalar_select 0, %s7, %s5
  $region1: #{tpu_custom_call.1} parent=0
    #allocation2 [shape = 'u8[8192]{0}', space=vmem, size = 0x2000, scoped, tag = 'input window, operand 0']
    #allocation3 [shape = 's32[2]{0}', space=sflag, size = 0x8, scoped, tag = 'scoped memory for tpu_custom_call.1']
    #allocation4 [shape = 's32[2]{0}', space=sflag, size = 0x8, scoped, tag = 'scoped memory for tpu_custom_call.1']
    #allocation5 [shape = 'u8[16384]{0}', space=vmem, size = 0x4000, scoped, tag = 'input window, operand 1, single buffered']
    #allocation6 [shape = 's32[1]{0}', space=sflag, size = 0x4, scoped, tag = 'scoped memory for tpu_custom_call.1']
    #allocation7 [shape = 'u8[4096]{0}', space=vmem, size = 0x1000, scoped, tag = 'input window, operand 3, single buffered']
    #allocation8 [shape = 'u8[8192]{0}', space=vmem, size = 0x2000, scoped, tag = 'output window, operand 0']
    %9 = vsyncpa [#allocation3], 0
    %s10 = scalar_lea.sflag [#allocation3], 1
    %11 = vsyncpa %s10, 0
    %12 = vsyncpa [#allocation6], 0
    %13 = vsyncpa [#allocation4], 0
    %s14 = scalar_lea.sflag [#allocation4], 1
    %15 = vsyncpa %s14, 0
    loop: start=0, step=1, limit=4
    $region2: #{tpu_custom_call.1} parent=1 // loop_pre_header
      _
    $region3: #{tpu_custom_call.1} parent=1 // loop_header
      %s17 = sphi 0, %s21
      %p18 = scmp.ge.s32.totalorder %s17, 4
      %s24 = sphi 0, %s36
      %s25 = sphi 0, %s32
      %s26 = sphi 0, %s24
      %s27 = sphi 0, %s25
      %s28 = sphi 0, %s26
      %s29 = sphi 0, %s27
      %s41 = sphi 0, %s43
      %s44 = sphi 0, %s41
      %s45 = sphi 0, %s44
      %s61 = sphi 0, %s45
      %s65 = sphi 0, %s65
      %s67 = sphi 0, %s65
      %s68 = sphi 0, %s67
      %s82 = sphi 0, %s68
      %s86 = sphi 0, %s86
      %s88 = sphi 0, %s86
      %s89 = sphi 0, %s88
      %s103 = sphi 0, %s89
      %s109 = sphi 0, %s111
      %s112 = sphi 0, %s109
      %s113 = sphi 0, %s112
      %s129 = sphi 0, %s113
      %s137 = sphi 0, %s139
      %s140 = sphi 0, %s137
      %s141 = sphi 0, %s140
      %s157 = sphi 0, %s141
    $region4: #{tpu_custom_call.1} parent=1 // loop_header_branch
      %20 = sbr.rel (%p18) target = $region8
    $region5: #{tpu_custom_call.1} parent=1 // loop_body
      %s22 = ssub.s32 %s17, 1
      %s23 = ssub.s32 %s17, 2
      %s30 = sadd.s32 1, %s25
      %p31 = scmp.ge.s32.totalorder %s30, 1
      %s32 = scalar_select %p31, 0, %s30
      %s33 = sadd.s32 1, %s24
      %s34 = scalar_select %p31, %s33, %s24
      %p35 = scmp.ge.s32.totalorder %s34, 2
      %s36 = scalar_select %p35, 0, %s34
      %s37 = ssub.s32 %s24, %s36
      %s38 = ssub.s32 %s25, %s32
      %s39 = sor.u32 %s37, %s38
      %p40 = scmp.eq.s32.totalorder %s39, 0
      %s42 = sadd.s32 %s41, 1
      %s43 = scalar_select %p40, %s41, %s42
      %p46 = pneg %p40
      %p47 = scmp.eq.s32.totalorder %s17, 1
      %p48 = por %p46, %p47
      %p49 = scmp.ne.s32.totalorder %s41, %s44
      %p50 = scmp.eq.s32.totalorder %s17, 0
      %p51 = por %p49, %p50
      %p52 = scmp.ne.s32.totalorder %s41, %s44
      %p53 = scmp.eq.s32.totalorder %s22, 1
      %p54 = por %p52, %p53
      %p55 = scmp.ne.s32.totalorder %s44, %s45
      %p56 = scmp.eq.s32.totalorder %s22, 0
      %p57 = por %p55, %p56
      %p58 = scmp.ne.s32.totalorder %s44, %s45
      %p59 = scmp.eq.s32.totalorder %s23, 1
      %p60 = por %p58, %p59
      %p62 = scmp.ne.s32.totalorder %s45, %s61
      %p63 = scmp.eq.s32.totalorder %s23, 0
      %p64 = por %p62, %p63
      %s66 = sadd.s32 %s65, 1
      %p69 = scmp.eq.s32.totalorder %s17, 1
      %p70 = scmp.ne.s32.totalorder %s65, %s67
      %p71 = scmp.eq.s32.totalorder %s17, 0
      %p72 = por %p70, %p71
      %p73 = scmp.ne.s32.totalorder %s65, %s67
      %p74 = scmp.eq.s32.totalorder %s22, 1
      %p75 = por %p73, %p74
      %p76 = scmp.ne.s32.totalorder %s67, %s68
      %p77 = scmp.eq.s32.totalorder %s22, 0
      %p78 = por %p76, %p77
      %p79 = scmp.ne.s32.totalorder %s67, %s68
      %p80 = scmp.eq.s32.totalorder %s23, 1
      %p81 = por %p79, %p80
      %p83 = scmp.ne.s32.totalorder %s68, %s82
      %p84 = scmp.eq.s32.totalorder %s23, 0
      %p85 = por %p83, %p84
      %s87 = sadd.s32 %s86, 1
      %p90 = scmp.eq.s32.totalorder %s17, 1
      %p91 = scmp.ne.s32.totalorder %s86, %s88
      %p92 = scmp.eq.s32.totalorder %s17, 0
      %p93 = por %p91, %p92
      %p94 = scmp.ne.s32.totalorder %s86, %s88
      %p95 = scmp.eq.s32.totalorder %s22, 1
      %p96 = por %p94, %p95
      %p97 = scmp.ne.s32.totalorder %s88, %s89
      %p98 = scmp.eq.s32.totalorder %s22, 0
      %p99 = por %p97, %p98
      %p100 = scmp.ne.s32.totalorder %s88, %s89
      %p101 = scmp.eq.s32.totalorder %s23, 1
      %p102 = por %p100, %p101
      %p104 = scmp.ne.s32.totalorder %s89, %s103
      %p105 = scmp.eq.s32.totalorder %s23, 0
      %p106 = por %p104, %p105
      %s107 = ssub.s32 %s25, %s32
      %p108 = scmp.eq.s32.totalorder %s107, 0
      %s110 = sadd.s32 %s109, 1
      %s111 = scalar_select %p108, %s109, %s110
      %p114 = pneg %p108
      %p115 = scmp.eq.s32.totalorder %s17, 1
      %p116 = por %p114, %p115
      %p117 = scmp.ne.s32.totalorder %s109, %s112
      %p118 = scmp.eq.s32.totalorder %s17, 0
      %p119 = por %p117, %p118
      %p120 = scmp.ne.s32.totalorder %s109, %s112
      %p121 = scmp.eq.s32.totalorder %s22, 1
      %p122 = por %p120, %p121
      %p123 = scmp.ne.s32.totalorder %s112, %s113
      %p124 = scmp.eq.s32.totalorder %s22, 0
      %p125 = por %p123, %p124
      %p126 = scmp.ne.s32.totalorder %s112, %s113
      %p127 = scmp.eq.s32.totalorder %s23, 1
      %p128 = por %p126, %p127
      %p130 = scmp.ne.s32.totalorder %s113, %s129
      %p131 = scmp.eq.s32.totalorder %s23, 0
      %p132 = por %p130, %p131
      %s133 = ssub.s32 %s24, %s36
      %s134 = ssub.s32 %s25, %s32
      %s135 = sor.u32 %s133, %s134
      %p136 = scmp.eq.s32.totalorder %s135, 0
      %s138 = sadd.s32 %s137, 1
      %s139 = scalar_select %p136, %s137, %s138
      %p142 = pneg %p136
      %p143 = scmp.eq.s32.totalorder %s17, 1
      %p144 = por %p142, %p143
      %p145 = scmp.ne.s32.totalorder %s137, %s140
      %p146 = scmp.eq.s32.totalorder %s17, 0
      %p147 = por %p145, %p146
      %p148 = scmp.ne.s32.totalorder %s137, %s140
      %p149 = scmp.eq.s32.totalorder %s22, 1
      %p150 = por %p148, %p149
      %p151 = scmp.ne.s32.totalorder %s140, %s141
      %p152 = scmp.eq.s32.totalorder %s22, 0
      %p153 = por %p151, %p152
      %p154 = scmp.ne.s32.totalorder %s140, %s141
      %p155 = scmp.eq.s32.totalorder %s23, 1
      %p156 = por %p154, %p155
      %p158 = scmp.ne.s32.totalorder %s141, %s157
      %p159 = scmp.eq.s32.totalorder %s23, 0
      %p160 = por %p158, %p159
      %p161 = scmp.le.s32.totalorder 1, %s17
      %p162 = scmp.lt.s32.totalorder %s17, 3
      %p163 = pnand %p161, %p162
      %p164 = pneg %p163
      // Predicated region
      $region9: #{tpu_custom_call.1} parent=5 // pred_check
        _
      $region10: #{tpu_custom_call.1} parent=5 // pred_check_branch
        %166 = sbr.rel (%p163) target = $region12
      $region11: #{tpu_custom_call.1} parent=5 // pred_region
        %s167 = ssub.s32 %s17, 1
        // Predicated region
        $region13: #{tpu_custom_call.1} parent=11 // pred_check
          %p168 = pneg %p78
        $region14: #{tpu_custom_call.1} parent=11 // pred_check_branch
          %170 = sbr.rel (%p168) target = $region16
        $region15: #{tpu_custom_call.1} parent=11 // pred_region
          %172 = vsyncadd [#allocation6], 0
          %s173 = sshll.u32 %s1, 4
          %s174 = int_to_ptr.hbm [resolvable:$true] %s173
          %s175 = sshll.u32 [#allocation5], 4
          %s176 = int_to_ptr.vmem [resolvable:$true] %s175
          %181 = dma.hbm_to_vmem [thread:$0]  %s174, 512, %s176, [#allocation6], 128, 128, 8
        $region16: #{tpu_custom_call.1} parent=11 // pred_fallthru
          _
        // Predicated region
        $region17: #{tpu_custom_call.1} parent=11 // pred_check
          %p182 = pneg %p99
        $region18: #{tpu_custom_call.1} parent=11 // pred_check_branch
          %184 = sbr.rel (%p182) target = $region20
        $region19: #{tpu_custom_call.1} parent=11 // pred_region
          _
        $region20: #{tpu_custom_call.1} parent=11 // pred_fallthru
          _
        // Predicated region
        $region21: #{tpu_custom_call.1} parent=11 // pred_check
          %p185 = pneg %p125
        $region22: #{tpu_custom_call.1} parent=11 // pred_check_branch
          %187 = sbr.rel (%p185) target = $region24
        $region23: #{tpu_custom_call.1} parent=11 // pred_region
          %189 = vsyncadd [#allocation6], 0
          %s190 = smul.addr %s27, 8
          %s191 = scalar_lea.hbm %s3, %s190
          %s193 = sshll.u32 %s191, 4
          %s194 = int_to_ptr.hbm [resolvable:$true] %s193
          %s195 = sshll.u32 [#allocation7], 4
          %s196 = int_to_ptr.vmem [resolvable:$true] %s195
          %198 = dma.hbm_to_vmem [thread:$0]  %s194, 128, %s196, [#allocation6]
        $region24: #{tpu_custom_call.1} parent=11 // pred_fallthru
          _
      $region12: #{tpu_custom_call.1} parent=5 // pred_fallthru
        _
      %p199 = scmp.lt.s32.totalorder %s17, 2
      // Predicated region
      $region25: #{tpu_custom_call.1} parent=5 // pred_check
        %p200 = pneg %p199
      $region26: #{tpu_custom_call.1} parent=5 // pred_check_branch
        %202 = sbr.rel (%p200) target = $region28
      $region27: #{tpu_custom_call.1} parent=5 // pred_region
        // Predicated region
        $region29: #{tpu_custom_call.1} parent=27 // pred_check
          %p203 = pneg %p51
        $region30: #{tpu_custom_call.1} parent=27 // pred_check_branch
          %205 = sbr.rel (%p203) target = $region32
        $region31: #{tpu_custom_call.1} parent=27 // pred_region
          %s206 = sand.u32 %s41, 1
          %s207 = scalar_lea.sflag [#allocation3], %s206
          %s208 = sand.u32 %s41, 1
          %s209 = smul.addr %s208, 8
          %s210 = scalar_lea.vmem [#allocation2], %s209
          %212 = vsyncadd %s207, 0
          %s213 = sadd.s32 %s25, %s24
          %s214 = smul.addr %s213, 8
          %s215 = scalar_lea.hbm %s0, %s214
          %s217 = sshll.u32 %s215, 4
          %s218 = int_to_ptr.hbm [resolvable:$true] %s217
          %s219 = sshll.u32 %s210, 4
          %s220 = int_to_ptr.vmem [resolvable:$true] %s219
          %222 = dma.hbm_to_vmem [thread:$0]  %s218, 128, %s220, %s207
        $region32: #{tpu_custom_call.1} parent=27 // pred_fallthru
          _
      $region28: #{tpu_custom_call.1} parent=5 // pred_fallthru
        _
      %p223 = scmp.le.s32.totalorder 1, %s17
      %p224 = scmp.lt.s32.totalorder %s17, 3
      %p225 = pnand %p223, %p224
      %p226 = pneg %p225
      // Predicated region
      $region33: #{tpu_custom_call.1} parent=5 // pred_check
        _
      $region34: #{tpu_custom_call.1} parent=5 // pred_check_branch
        %228 = sbr.rel (%p225) target = $region36
      $region35: #{tpu_custom_call.1} parent=5 // pred_region
        %s229 = ssub.s32 %s17, 1
        %s230 = sand.u32 %s44, 1
        %s231 = scalar_lea.sflag [#allocation3], %s230
        %s232 = sand.u32 %s44, 1
        %s233 = smul.addr %s232, 8
        %s234 = scalar_lea.vmem [#allocation2], %s233
        // Predicated region
        $region37: #{tpu_custom_call.1} parent=35 // pred_check
          %p235 = pneg %p57
        $region38: #{tpu_custom_call.1} parent=35 // pred_check_branch
          %237 = sbr.rel (%p235) target = $region40
        $region39: #{tpu_custom_call.1} parent=35 // pred_region
          %239 = dma.done %s231, 128
        $region40: #{tpu_custom_call.1} parent=35 // pred_fallthru
          _
        // Predicated region
        $region41: #{tpu_custom_call.1} parent=35 // pred_check
          %p240 = pneg %p78
        $region42: #{tpu_custom_call.1} parent=35 // pred_check_branch
          %242 = sbr.rel (%p240) target = $region44
        $region43: #{tpu_custom_call.1} parent=35 // pred_region
          %244 = dma.done [#allocation6], 512
        $region44: #{tpu_custom_call.1} parent=35 // pred_fallthru
          _
        // Predicated region
        $region45: #{tpu_custom_call.1} parent=35 // pred_check
          %p245 = pneg %p125
        $region46: #{tpu_custom_call.1} parent=35 // pred_check_branch
          %247 = sbr.rel (%p245) target = $region48
        $region47: #{tpu_custom_call.1} parent=35 // pred_region
          %249 = dma.done [#allocation6], 128
        $region48: #{tpu_custom_call.1} parent=35 // pred_fallthru
          _
        %s250 = sand.u32 %s44, 1
        %s251 = scalar_lea.sflag [#allocation3], %s250
        %s252 = sand.u32 %s44, 1
        %s253 = smul.addr %s252, 8
        %s254 = scalar_lea.vmem [#allocation2], %s253
        %p255 = pneg %p57
        %p256 = pneg %p54
        %p257 = pneg %p78
        %p258 = pneg %p75
        %p259 = pneg %p99
        %p260 = pneg %p96
        %p261 = pneg %p125
        %p262 = pneg %p122
        %p263 = pneg %p153
        %p264 = pneg %p150
        %s265 = sand.u32 %s140, 1
        %s266 = scalar_lea.sflag [#allocation4], %s265
        %s267 = sand.u32 %s140, 1
        %s268 = smul.addr %s267, 8
        %s269 = scalar_lea.vmem [#allocation8], %s268
        %v270 = vld [vmem:[%s234] sm:$0xff]
        %v271 = vld [vmem:[#allocation5] sm:$0xff]
        %v272 = vld [vmem:[#allocation5 + $0x8] sm:$0xff]
        %v273 = vld [vmem:[#allocation5 + $0x10] sm:$0xff]
        %v274 = vld [vmem:[#allocation5 + $0x18] sm:$0xff]
        %v275 = vld [vmem:[%s2] sm:$0x1]
        %v277 = vperm.slane %v275, 0
        %vm279 = vcmask 261120
        %v281 = vsel %vm279, %v270, 0
        %283 = vmatpush.msra.mxu0 0.0
        %284 = vmatpush.msra.mxu0 0.0
        %285 = vmatpush.msra.mxu0 0.0
        %286 = vmatpush.msra.mxu0 0.0
        %287 = vmatpush.msra.mxu0 0.0
        %288 = vmatpush.msra.mxu0 0.0
        %289 = vmatpush.msra.mxu0 0.0
        %290 = vmatpush.msra.mxu0 0.0
        %291 = vmatpush.msra.mxu0 0.0
        %292 = vmatpush.msra.mxu0 0.0
        %293 = vmatpush.msra.mxu0 0.0
        %294 = vmatpush.msra.mxu0 0.0
        %295 = vmatpush.msra.mxu0 %v274
        %296 = vmatpush.msra.mxu0 %v273
        %297 = vmatpush.msra.mxu0 %v272
        %298 = vmatpush.msra.mxu0 %v271
        %299 = vmatmul.f32.gmra.mxu0 %v281
        %v300 = vpop.f32.mrf.mxu0
        %v301 = vadd.f32 %v277, %v300
        %302 = vdwg.mxu0
        %v303 = vld [vmem:[#allocation7] sm:$0xff]
        %v304 = vmul.f32 %v301, %v303
        %306 = vrot.lane.b32.xlu0 %v304, 112
        %v307 = vpop.permute.xlu0 %306
        %v309 = vadd.f32 %v304, %v307
        %v310 = vxor.u32 %v309, 2147483648
        %v311 = vmul.f32 %v310, 1.442695
        %v312 = vpow.pop %v311
        %v313 = vadd.f32 %v312, 1.0
        %v314 = vrcp.pop %v313
        %v315 = vmul.f32 %v313, %v314
        %v316 = vsub.f32 1.0, %v315
        %v317 = vmul.f32 %v314, %v316
        %v318 = vadd.f32 %v314, %v317
        %vm319 = vweird.f32 %v313
        %vm320 = vweird.f32 %v314
        %vm321 = vmor %vm319, %vm320
        %v322 = vsel %vm321, %v314, %v318
        %v323 = vand.u32 2147483647, %v313
        %vm324 = vcmp.eq.f32.partialorder %v323, 8.507059e+37
        %v325 = vand.u32 %v313, 2147483648
        %v326 = vor.u32 1.1754944e-38, %v325
        %v327 = vsel %vm324, %v326, %v322
        %v328 = vmul.f32 1.0, %v327
        %vm329 = vcmask 130048
        %330 = vst.msk [vmem:[%s269] sm:$0xff] %vm329, %v328
        %s331 = sand.u32 %s140, 1
        %s332 = scalar_lea.sflag [#allocation4], %s331
        %s333 = sand.u32 %s140, 1
        %s334 = smul.addr %s333, 8
        %s335 = scalar_lea.vmem [#allocation8], %s334
        // Predicated region
        $region49: #{tpu_custom_call.1} parent=35 // pred_check
          %p336 = pneg %p150
        $region50: #{tpu_custom_call.1} parent=35 // pred_check_branch
          %338 = sbr.rel (%p336) target = $region52
        $region51: #{tpu_custom_call.1} parent=35 // pred_region
          %340 = vsyncadd %s332, 0
          %s341 = sadd.s32 %s27, %s26
          %s342 = smul.addr %s341, 8
          %s343 = scalar_lea.hbm %s4, %s342
          %s345 = sshll.u32 %s335, 4
          %s346 = int_to_ptr.vmem [resolvable:$true] %s345
          %s347 = sshll.u32 %s343, 4
          %s348 = int_to_ptr.hbm [resolvable:$true] %s347
          %350 = dma.vmem_to_hbm [thread:$0]  %s346, 128, %s348, %s332
        $region52: #{tpu_custom_call.1} parent=35 // pred_fallthru
          _
      $region36: #{tpu_custom_call.1} parent=5 // pred_fallthru
        _
      %p351 = scmp.le.s32.totalorder 2, %s17
      // Predicated region
      $region53: #{tpu_custom_call.1} parent=5 // pred_check
        %p352 = pneg %p351
      $region54: #{tpu_custom_call.1} parent=5 // pred_check_branch
        %354 = sbr.rel (%p352) target = $region56
      $region55: #{tpu_custom_call.1} parent=5 // pred_region
        %s355 = ssub.s32 %s17, 2
        // Predicated region
        $region57: #{tpu_custom_call.1} parent=55 // pred_check
          %p356 = pneg %p156
        $region58: #{tpu_custom_call.1} parent=55 // pred_check_branch
          %358 = sbr.rel (%p356) target = $region60
        $region59: #{tpu_custom_call.1} parent=55 // pred_region
          %s359 = sand.u32 %s141, 1
          %s360 = scalar_lea.sflag [#allocation4], %s359
          %s361 = sand.u32 %s141, 1
          %s362 = smul.addr %s361, 8
          %s363 = scalar_lea.vmem [#allocation8], %s362
          %365 = dma.done %s360, 128
        $region60: #{tpu_custom_call.1} parent=55 // pred_fallthru
          _
      $region56: #{tpu_custom_call.1} parent=5 // pred_fallthru
        _
    $region6: #{tpu_custom_call.1} parent=1 // loop_footer
      %s21 = sadd.s32 1, %s17
    $region7: #{tpu_custom_call.1} parent=1 // loop_footer_branch
      %16 = sbr.rel target = $region3
    $region8: #{tpu_custom_call.1} parent=1 // loop_exit
      _
    %366 = vsyncpa [#allocation3], 1
    %s367 = scalar_lea.sflag [#allocation3], 1
    %368 = vsyncpa %s367, 1
    %369 = vsyncpa [#allocation6], 1
    %370 = vsyncpa [#allocation4], 1
    %s371 = scalar_lea.sflag [#allocation4], 1
    %372 = vsyncpa %s371, 1

</llo_original>
